<compile_context>
chip_gen: v6e
topology: v6e:2x2x1
jax: 0.10.0
libtpu: 0.0.40
codegen_flags: <defaults>
</compile_context>

<pallas_src>
import functools

import jax
import jax.numpy as jnp
from jax.experimental import pallas as pl
from jax.experimental.pallas import tpu as pltpu

BN_EPS = 1e-5
LANE = 128
SUBLANE = 8


def _round_up(n, m):
    return ((n + m - 1) // m) * m


# ---------------------------------------------------------------------------
# Kernel: a stack of (Linear + bias [+ ReLU]) layers, all params VMEM-resident.
# ---------------------------------------------------------------------------
def _make_mlp_kernel(num_layers):
    """num_layers = number of (W, b) pairs; ReLU after all but the last."""

    def kernel(*refs):
        x_ref = refs[0]
        out_ref = refs[-1]
        params = refs[1:-1]

        h = x_ref[...]                       # (tb, in_dim) — real feature width
        for li in range(num_layers):
            w = params[2 * li][...]
            b = params[2 * li + 1][...]
            h = jnp.dot(h, w, preferred_element_type=jnp.float32) + b
            if li < num_layers - 1:
                # ReLU (VPU).  Dropout is identity in eval mode.
                # TODO(synk): train-mode dropout (random mask via pltpu.prng_*) not implemented.
                h = jnp.maximum(h, 0.0)
        out_ref[...] = h                     # (tb, 1) — only the real column

    return kernel


# ---------------------------------------------------------------------------
# Wrapper-side algebra: fold eval-mode BN into the *next* Linear, pad hiddens.
# ---------------------------------------------------------------------------
def _fold_bn_into_linears(params, eps=BN_EPS):
    """params: hidden tuples (W, b, gamma, beta, rmean, rvar) + final (W, b).

    Returns (W, b) pairs (ReLU after all but the last) numerically equivalent
    to Linear -> ReLU -> BN(eval) per hidden layer + final Linear.  Because the
    order is Linear -> ReLU -> BN, each BN's affine folds into the FOLLOWING
    layer's Linear.
    """
    layers = []
    scale, shift = None, None
    for (w, b, gamma, beta, rmean, rvar) in params[:-1]:
        if scale is not None:
            b = b + shift @ w                 # uses un-scaled W
            w = scale.reshape(-1, 1) * w
        layers.append((w, b))
        s = gamma * jax.lax.rsqrt(rvar + eps)
        scale, shift = s, beta - rmean * s
    w, b = params[-1]
    if scale is not None:
        b = b + shift @ w
        w = scale.reshape(-1, 1) * w
    layers.append((w, b))
    return layers


def _pad_layers(layers, lane=LANE):
    """Zero-pad hidden dims to lane multiples.

    The first layer keeps its real input width (so x needs no feature padding)
    and the last layer keeps its real 1-unit output (so the store is only the
    real column).  Only the internal hidden widths are padded to 128 lanes so
    the middle matmuls and activations stay lane-dense.
    """
    padded = []
    last = len(layers) - 1
    for li, (w, b) in enumerate(layers):
        w = jnp.asarray(w, jnp.float32)
        b = jnp.asarray(b, jnp.float32).reshape(1, -1)
        in_d, out_d = w.shape
        in_p = in_d if li == 0 else _round_up(in_d, lane)
        out_p = out_d if li == last else _round_up(out_d, lane)
        w_p = jnp.zeros((in_p, out_p), jnp.float32).at[:in_d, :out_d].set(w)
        b_p = jnp.zeros((1, out_p), jnp.float32).at[:, :out_d].set(b)
        padded.append((w_p, b_p))
    return padded


def prepare_params(params):
    """Fold BN + pad ONCE; reuse the result for every forward call."""
    return _pad_layers(_fold_bn_into_linears(params))


# ---------------------------------------------------------------------------
# Forward wrapper (jitted so pad / slice / pallas_call dispatch as one program).
# ---------------------------------------------------------------------------
@functools.partial(jax.jit, static_argnames=("tb_max",))
def boston_housing_forward(x, prepared_layers, *, tb_max=2048):
    """Run the fused MLP forward pass as one Pallas call.

    x: (batch, input_dim) f32.
    prepared_layers: output of prepare_params(params) — folded + padded (W, b).
    """
    layers = prepared_layers
    num_layers = len(layers)

    batch, in_dim = x.shape
    assert layers[0][0].shape[0] == in_dim, (layers[0][0].shape, in_dim)
    out_dim = layers[-1][0].shape[1]          # = 1

    # Batch tiling: as few, as large tiles as possible (per-grid-step overhead
    # ~0.35 us) with minimal tail padding.  Even at tb=2048 the f32 tiles are
    # well under a few MiB double-buffered, far inside every generation's VMEM.
    batch8 = _round_up(batch, SUBLANE)
    num_tiles = pl.cdiv(batch8, tb_max)
    tb = _round_up(pl.cdiv(batch8, num_tiles), SUBLANE)
    batch_pad = tb * num_tiles

    x = x.astype(jnp.float32)
    if batch_pad != batch:
        # Only pads the (rare) ragged tail rows at the real 13-feature width.
        x_p = jnp.zeros((batch_pad, in_dim), jnp.float32).at[:batch].set(x)
    else:
        x_p = x

    flat = [a for lw in layers for a in lw]
    kernel = _make_mlp_kernel(num_layers)

    # Input x at its real feature width (last block dim == full array dim).
    in_specs = [pl.BlockSpec((tb, in_dim), lambda i: (i, 0))]
    for (w, b) in layers:
        in_specs.append(pl.BlockSpec(w.shape, lambda i: (0, 0)))   # VMEM-resident
        in_specs.append(pl.BlockSpec(b.shape, lambda i: (0, 0)))
    # Output is only the real 1-unit column: 4 B/row writeback instead of 512.
    out_specs = pl.BlockSpec((tb, out_dim), lambda i: (i, 0))

    out = pl.pallas_call(
        kernel,
        out_shape=jax.ShapeDtypeStruct((batch_pad, out_dim), jnp.float32),
        grid=(num_tiles,),
        in_specs=in_specs,
        out_specs=out_specs,
        compiler_params=pltpu.CompilerParams(
            dimension_semantics=("parallel",)),   # batch tiles independent → v7x 2-TC sharding
    )(x_p, *flat)

    return out[:batch]


# ---------------------------------------------------------------------------
# Deterministic param init matching the PyTorch module's shapes + pure-JAX ref.
# ---------------------------------------------------------------------------
def init_params(key, input_dim, hidden_layers):
    params = []
    in_dim = input_dim
    for units in hidden_layers:
        key, k_w, k_b, k_m, k_v = jax.random.split(key, 5)
        # Linear: stored transposed as (in, out)
        w = (jax.random.normal(k_w, (in_dim, units), jnp.float32)
             * (1.0 / jnp.sqrt(in_dim)))
        b = jax.random.normal(k_b, (1, units), jnp.float32) * 0.01
        # BatchNorm1d affine + running stats
        gamma = jnp.ones((1, units), jnp.float32)
        beta = jnp.zeros((1, units), jnp.float32)
        rmean = jax.random.normal(k_m, (1, units), jnp.float32) * 0.1
        rvar = jnp.abs(jax.random.normal(k_v, (1, units), jnp.float32)) * 0.1 + 1.0
        params.append((w, b, gamma, beta, rmean, rvar))
        in_dim = units
    key, k_w, k_b = jax.random.split(key, 3)
    w_out = (jax.random.normal(k_w, (in_dim, 1), jnp.float32)
             * (1.0 / jnp.sqrt(in_dim)))
    b_out = jax.random.normal(k_b, (1, 1), jnp.float32) * 0.01
    params.append((w_out, b_out))
    return params


def reference_forward(x, params):
    """Pure-JAX reference of the ORIGINAL (unfolded) eval-mode forward pass."""
    h = x
    for (w, b, gamma, beta, rmean, rvar) in params[:-1]:
        h = h @ w + b
        h = jnp.maximum(h, 0.0)
        h = (h - rmean) * jax.lax.rsqrt(rvar + BN_EPS) * gamma + beta
    w, b = params[-1]
    return h @ w + b


if __name__ == "__main__":
    # Boston housing: 13 input features; small synthetic config.
    input_dim = 13
    hidden_layers = [64, 32]
    batch = 8

    key = jax.random.PRNGKey(0)
    key, k_x = jax.random.split(key)
    x = jax.random.normal(k_x, (batch, input_dim), jnp.float32)

    params = init_params(key, input_dim, hidden_layers)
    prepared = prepare_params(params)      # fold BN + pad once, reuse every call

    out = boston_housing_forward(x, prepared)
    out = jax.block_until_ready(out)

    ref = reference_forward(x, params)
    assert out.shape == (batch, 1), out.shape
    assert jnp.allclose(out, ref, atol=1e-4, rtol=1e-4), (out, ref)

    print("KERNEL_OK")
</pallas_src>

<mosaic_0001>
module attributes {stable_mosaic.version = 11 : i64} {
  func.func @kernel(%arg0: i32, %arg1: memref<8x13xf32, #tpu.memory_space<vmem>>, %arg2: memref<13x128xf32, #tpu.memory_space<vmem>>, %arg3: memref<1x128xf32, #tpu.memory_space<vmem>>, %arg4: memref<128x128xf32, #tpu.memory_space<vmem>>, %arg5: memref<1x128xf32, #tpu.memory_space<vmem>>, %arg6: memref<128x1xf32, #tpu.memory_space<vmem>>, %arg7: memref<1x1xf32, #tpu.memory_space<vmem>>, %arg8: memref<8x1xf32, #tpu.memory_space<vmem>>) attributes {dimension_semantics = [#tpu.dimension_semantics<parallel>], iteration_bounds = array<i64: 1>, scalar_prefetch = 0 : i64, scratch_operands = 0 : i64, tpu.core_type = #tpu.core_type<tc>, window_params = [{transform_indices = @transform_0, window_bounds = array<i64: 8, 13>}, {pipeline_mode = #tpu.pipeline_mode<synchronous>, transform_indices = @transform_1, window_bounds = array<i64: 13, 128>}, {pipeline_mode = #tpu.pipeline_mode<synchronous>, transform_indices = @transform_2, window_bounds = array<i64: 1, 128>}, {pipeline_mode = #tpu.pipeline_mode<synchronous>, transform_indices = @transform_3, window_bounds = array<i64: 128, 128>}, {pipeline_mode = #tpu.pipeline_mode<synchronous>, transform_indices = @transform_4, window_bounds = array<i64: 1, 128>}, {pipeline_mode = #tpu.pipeline_mode<synchronous>, transform_indices = @transform_5, window_bounds = array<i64: 128, 1>}, {pipeline_mode = #tpu.pipeline_mode<synchronous>, transform_indices = @transform_6, window_bounds = array<i64: 1, 1>}, {transform_indices = @transform_7, window_bounds = array<i64: 8, 1>}]} {
    %c0 = arith.constant 0 : index
    %c0_0 = arith.constant 0 : index
    %0 = vector.load %arg1[%c0, %c0_0] : memref<8x13xf32, #tpu.memory_space<vmem>>, vector<8x13xf32>
    %c0_1 = arith.constant 0 : index
    %c0_2 = arith.constant 0 : index
    %1 = vector.load %arg2[%c0_1, %c0_2] : memref<13x128xf32, #tpu.memory_space<vmem>>, vector<13x128xf32>
    %c0_3 = arith.constant 0 : index
    %c0_4 = arith.constant 0 : index
    %2 = vector.load %arg3[%c0_3, %c0_4] : memref<1x128xf32, #tpu.memory_space<vmem>>, vector<1x128xf32>
    %cst = arith.constant dense<0.000000e+00> : vector<8x128xf32>
    %3 = tpu.matmul %0, %1, %cst {dimension_numbers = #tpu.dot_dimension_numbers<[1], [0], [0], [1], [0, 0, 1, 1], [], []>} : vector<8x13xf32>, vector<13x128xf32>, vector<8x128xf32> -> vector<8x128xf32>
    %4 = vector.broadcast %2 : vector<1x128xf32> to vector<8x128xf32>
    %5 = arith.addf %3, %4 : vector<8x128xf32>
    %cst_5 = arith.constant 0.000000e+00 : f32
    %6 = vector.broadcast %cst_5 : f32 to vector<8x128xf32>
    %7 = arith.maximumf %5, %6 : vector<8x128xf32>
    %c0_6 = arith.constant 0 : index
    %c0_7 = arith.constant 0 : index
    %8 = vector.load %arg4[%c0_6, %c0_7] : memref<128x128xf32, #tpu.memory_space<vmem>>, vector<128x128xf32>
    %c0_8 = arith.constant 0 : index
    %c0_9 = arith.constant 0 : index
    %9 = vector.load %arg5[%c0_8, %c0_9] : memref<1x128xf32, #tpu.memory_space<vmem>>, vector<1x128xf32>
    %cst_10 = arith.constant dense<0.000000e+00> : vector<8x128xf32>
    %10 = tpu.matmul %7, %8, %cst_10 {dimension_numbers = #tpu.dot_dimension_numbers<[1], [0], [0], [1], [0, 0, 1, 1], [], []>} : vector<8x128xf32>, vector<128x128xf32>, vector<8x128xf32> -> vector<8x128xf32>
    %11 = vector.broadcast %9 : vector<1x128xf32> to vector<8x128xf32>
    %12 = arith.addf %10, %11 : vector<8x128xf32>
    %cst_11 = arith.constant 0.000000e+00 : f32
    %13 = vector.broadcast %cst_11 : f32 to vector<8x128xf32>
    %14 = arith.maximumf %12, %13 : vector<8x128xf32>
    %c0_12 = arith.constant 0 : index
    %c0_13 = arith.constant 0 : index
    %15 = vector.load %arg6[%c0_12, %c0_13] : memref<128x1xf32, #tpu.memory_space<vmem>>, vector<128x1xf32>
    %c0_14 = arith.constant 0 : index
    %c0_15 = arith.constant 0 : index
    %16 = vector.load %arg7[%c0_14, %c0_15] : memref<1x1xf32, #tpu.memory_space<vmem>>, vector<1x1xf32>
    %cst_16 = arith.constant dense<0.000000e+00> : vector<8x1xf32>
    %17 = tpu.matmul %14, %15, %cst_16 {dimension_numbers = #tpu.dot_dimension_numbers<[1], [0], [0], [1], [0, 0, 1, 1], [], []>} : vector<8x128xf32>, vector<128x1xf32>, vector<8x1xf32> -> vector<8x1xf32>
    %18 = vector.broadcast %16 : vector<1x1xf32> to vector<8x1xf32>
    %19 = arith.addf %17, %18 : vector<8x1xf32>
    %c0_17 = arith.constant 0 : index
    %c0_18 = arith.constant 0 : index
    %20 = vector.load %arg8[%c0_17, %c0_18] : memref<8x1xf32, #tpu.memory_space<vmem>>, vector<8x1xf32>
    tpu.vector_store %arg8[%c0_17, %c0_18], %19 {strides = array<i32>} : memref<8x1xf32, #tpu.memory_space<vmem>>, vector<8x1xf32>,
    return
  }
  func.func @transform_0(%arg0: i32) -> (i32, i32) {
    %c0_i32 = arith.constant 0 : i32
    %c0_i32_0 = arith.constant 0 : i32
    return %arg0, %c0_i32 : i32, i32
  }
  func.func @transform_1(%arg0: i32) -> (i32, i32) {
    %c0_i32 = arith.constant 0 : i32
    %c0_i32_0 = arith.constant 0 : i32
    %c0_i32_1 = arith.constant 0 : i32
    return %c0_i32, %c0_i32_0 : i32, i32
  }
  func.func @transform_2(%arg0: i32) -> (i32, i32) {
    %c0_i32 = arith.constant 0 : i32
    %c0_i32_0 = arith.constant 0 : i32
    %c0_i32_1 = arith.constant 0 : i32
    return %c0_i32, %c0_i32_0 : i32, i32
  }
  func.func @transform_3(%arg0: i32) -> (i32, i32) {
    %c0_i32 = arith.constant 0 : i32
    %c0_i32_0 = arith.constant 0 : i32
    %c0_i32_1 = arith.constant 0 : i32
    return %c0_i32, %c0_i32_0 : i32, i32
  }
  func.func @transform_4(%arg0: i32) -> (i32, i32) {
    %c0_i32 = arith.constant 0 : i32
    %c0_i32_0 = arith.constant 0 : i32
    %c0_i32_1 = arith.constant 0 : i32
    return %c0_i32, %c0_i32_0 : i32, i32
  }
  func.func @transform_5(%arg0: i32) -> (i32, i32) {
    %c0_i32 = arith.constant 0 : i32
    %c0_i32_0 = arith.constant 0 : i32
    %c0_i32_1 = arith.constant 0 : i32
    return %c0_i32, %c0_i32_0 : i32, i32
  }
  func.func @transform_6(%arg0: i32) -> (i32, i32) {
    %c0_i32 = arith.constant 0 : i32
    %c0_i32_0 = arith.constant 0 : i32
    %c0_i32_1 = arith.constant 0 : i32
    return %c0_i32, %c0_i32_0 : i32, i32
  }
  func.func @transform_7(%arg0: i32) -> (i32, i32) {
    %c0_i32 = arith.constant 0 : i32
    %c0_i32_0 = arith.constant 0 : i32
    return %arg0, %c0_i32 : i32, i32
  }
}

</mosaic_0001>

<llo_original>
// kernel: boston_housing_forward.1
$region0: #{boston_housing_forward.1}
  #allocation0 [shape = 'u32[]', space=smem, size = 0x4, offset = 0x4, fixed_abs, tag = 'smem constant byte address 0x4 - core index']
  #allocation1 [shape = 'u32[144,128]{1,0:T(1,128)}', space=vmem, size = 0x12000, scoped, tag = 'internal scratch']
  #allocation2 [shape = 'f32[1,1]{1,0:T(1,128)S(1)}', space=vmem, size = 0x200, scoped, tag = 'scoped memory for boston_housing_forward.1']
  %s0 = inlined_call_operand.vmem [shape: f32[8,13], index: 0, kind: input, shape index: {}]
  %s1 = inlined_call_operand.hbm [shape: f32[13,128], index: 1, kind: input, shape index: {}]
  %s2 = inlined_call_operand.hbm [shape: f32[1,128], index: 2, kind: input, shape index: {}]
  %s3 = inlined_call_operand.vmem [shape: f32[128,128], index: 3, kind: input, shape index: {}]
  %s4 = inlined_call_operand.vmem [shape: f32[1,128], index: 4, kind: input, shape index: {}]
  %s5 = inlined_call_operand.vmem [shape: f32[128,1], index: 5, kind: input, shape index: {}]
  %s6 = inlined_call_operand.<no memory space> [shape: f32[1,1], index: 6, kind: input, shape index: {}]
  %s7 = inlined_call_operand.vmem [shape: f32[8,1], index: 7, kind: output, shape index: {}]
  %s8 = sld [smem:[#allocation0]]
  $region46: #{boston_housing_forward.1} parent=0
    _
  %s10 = ssub.s32 1, %s8
  %s11 = scalar_select 0, %s10, %s8
  %v12 = vstv %s6
  %13 = vst [vmem:[#allocation2] sm:$0x1] %v12
  $region1: #{boston_housing_forward.1} parent=0
    #allocation3 [shape = 'u8[8192]{0}', space=vmem, size = 0x2000, scoped, tag = 'input window, operand 1, single buffered']
    #allocation4 [shape = 's32[1]{0}', space=sflag, size = 0x4, scoped, tag = 'scoped memory for boston_housing_forward.1']
    #allocation5 [shape = 'u8[512]{0}', space=vmem, size = 0x400, scoped, tag = 'input window, operand 2, single buffered']
    #allocation6 [shape = 's32[1]{0}', space=sflag, size = 0x4, scoped, tag = 'scoped memory for boston_housing_forward.1']
    %14 = vsyncpa [#allocation4], 0
    %15 = vsyncpa [#allocation6], 0
    // Predicated region
    $region2: #{boston_housing_forward.1} parent=1 // pred_check
      _
    $region3: #{boston_housing_forward.1} parent=1 // pred_check_branch
      %17 = sbr.rel (0) target = $region5
    $region4: #{boston_housing_forward.1} parent=1 // pred_region
      _
    $region5: #{boston_housing_forward.1} parent=1 // pred_fallthru
      _
    // Predicated region
    $region6: #{boston_housing_forward.1} parent=1 // pred_check
      _
    $region7: #{boston_housing_forward.1} parent=1 // pred_check_branch
      %19 = sbr.rel (0) target = $region9
    $region8: #{boston_housing_forward.1} parent=1 // pred_region
      %s21 = ssub.s32 256, 256
      %22 = vsyncadd [#allocation4], %s21
      %s23 = sshll.u32 [#allocation3], 4
      %s24 = int_to_ptr.vmem [resolvable:$true] %s23
      %29 = dma.hbm_to_vmem [thread:$0]  %s1, 256, %s24, [#allocation4], 128, 128, 8
    $region9: #{boston_housing_forward.1} parent=1 // pred_fallthru
      _
    // Predicated region
    $region10: #{boston_housing_forward.1} parent=1 // pred_check
      _
    $region11: #{boston_housing_forward.1} parent=1 // pred_check_branch
      %31 = sbr.rel (0) target = $region13
    $region12: #{boston_housing_forward.1} parent=1 // pred_region
      %s33 = ssub.s32 16, 16
      %34 = vsyncadd [#allocation6], %s33
      %s36 = sshll.u32 [#allocation5], 4
      %s37 = int_to_ptr.vmem [resolvable:$true] %s36
      %39 = dma.hbm_to_vmem [thread:$0]  %s2, 16, %s37, [#allocation6]
    $region13: #{boston_housing_forward.1} parent=1 // pred_fallthru
      _
    // Predicated region
    $region14: #{boston_housing_forward.1} parent=1 // pred_check
      _
    $region15: #{boston_housing_forward.1} parent=1 // pred_check_branch
      %41 = sbr.rel (0) target = $region17
    $region16: #{boston_housing_forward.1} parent=1 // pred_region
      _
    $region17: #{boston_housing_forward.1} parent=1 // pred_fallthru
      _
    // Predicated region
    $region18: #{boston_housing_forward.1} parent=1 // pred_check
      _
    $region19: #{boston_housing_forward.1} parent=1 // pred_check_branch
      %43 = sbr.rel (0) target = $region21
    $region20: #{boston_housing_forward.1} parent=1 // pred_region
      _
    $region21: #{boston_housing_forward.1} parent=1 // pred_fallthru
      _
    // Predicated region
    $region22: #{boston_housing_forward.1} parent=1 // pred_check
      _
    $region23: #{boston_housing_forward.1} parent=1 // pred_check_branch
      %45 = sbr.rel (0) target = $region25
    $region24: #{boston_housing_forward.1} parent=1 // pred_region
      _
    $region25: #{boston_housing_forward.1} parent=1 // pred_fallthru
      _
    // Predicated region
    $region26: #{boston_housing_forward.1} parent=1 // pred_check
      _
    $region27: #{boston_housing_forward.1} parent=1 // pred_check_branch
      %47 = sbr.rel (0) target = $region29
    $region28: #{boston_housing_forward.1} parent=1 // pred_region
      _
    $region29: #{boston_housing_forward.1} parent=1 // pred_fallthru
      _
    // Predicated region
    $region30: #{boston_housing_forward.1} parent=1 // pred_check
      _
    $region31: #{boston_housing_forward.1} parent=1 // pred_check_branch
      %49 = sbr.rel (0) target = $region33
    $region32: #{boston_housing_forward.1} parent=1 // pred_region
      %50 = dma.done [#allocation4], 256
    $region33: #{boston_housing_forward.1} parent=1 // pred_fallthru
      _
    // Predicated region
    $region34: #{boston_housing_forward.1} parent=1 // pred_check
      _
    $region35: #{boston_housing_forward.1} parent=1 // pred_check_branch
      %52 = sbr.rel (0) target = $region37
    $region36: #{boston_housing_forward.1} parent=1 // pred_region
      %53 = dma.done [#allocation6], 16
    $region37: #{boston_housing_forward.1} parent=1 // pred_fallthru
      _
    %v54 = vld [vmem:[%s0] sm:$0xff]
    %v55 = vld [vmem:[#allocation3] sm:$0xff]
    %v56 = vld [vmem:[#allocation3 + $0x8] sm:$0x1f]
    %v57 = vld [vmem:[#allocation5] sm:$0x1]
    %v59 = vlaneseq
    %v60 = vshrl.u32 %v59, 7
    %v61 = vsub.s32 0, %v60
    %v62 = vrot.slane %v57, %v61
    %vm64 = vcmask 105472
    %v66 = vsel %vm64, %v54, 0
    %vm68 = vcmask 1044480
    %v70 = vsel %vm68, %v56, 0
    %72 = vmatprep.subr.mxu0 0.0
    %73 = vmatpush1.msra.mxu0 0.0
    %74 = vmatprep.subr.mxu0 0.0
    %75 = vmatpush1.msra.mxu0 0.0
    %76 = vmatprep.subr.mxu0 0.0
    %77 = vmatpush1.msra.mxu0 0.0
    %78 = vmatprep.subr.mxu0 0.0
    %79 = vmatpush1.msra.mxu0 0.0
    %80 = vmatprep.subr.mxu0 0.0
    %81 = vmatpush1.msra.mxu0 0.0
    %82 = vmatprep.subr.mxu0 0.0
    %83 = vmatpush1.msra.mxu0 0.0
    %84 = vmatprep.subr.mxu0 0.0
    %85 = vmatpush1.msra.mxu0 0.0
    %86 = vmatprep.subr.mxu0 0.0
    %87 = vmatpush1.msra.mxu0 0.0
    %88 = vmatprep.subr.mxu0 0.0
    %89 = vmatpush1.msra.mxu0 0.0
    %90 = vmatprep.subr.mxu0 0.0
    %91 = vmatpush1.msra.mxu0 0.0
    %92 = vmatprep.subr.mxu0 0.0
    %93 = vmatpush1.msra.mxu0 0.0
    %94 = vmatprep.subr.mxu0 0.0
    %95 = vmatpush1.msra.mxu0 0.0
    %96 = vmatprep.subr.mxu0 0.0
    %97 = vmatpush1.msra.mxu0 0.0
    %98 = vmatprep.subr.mxu0 0.0
    %99 = vmatpush1.msra.mxu0 0.0
    %100 = vmatprep.subr.mxu0 0.0
    %101 = vmatpush1.msra.mxu0 %v70
    %102 = vmatprep.subr.mxu0 0.0
    %103 = vmatpush1.msra.mxu0 %v55
    %104 = vmatprep.subr.mxu0 0.0
    %105 = vmatpush2.msra.mxu0 0.0
    %106 = vmatprep.subr.mxu0 0.0
    %107 = vmatpush2.msra.mxu0 0.0
    %108 = vmatprep.subr.mxu0 0.0
    %109 = vmatpush2.msra.mxu0 0.0
    %110 = vmatprep.subr.mxu0 0.0
    %111 = vmatpush2.msra.mxu0 0.0
    %112 = vmatprep.subr.mxu0 0.0
    %113 = vmatpush2.msra.mxu0 0.0
    %114 = vmatprep.subr.mxu0 0.0
    %115 = vmatpush2.msra.mxu0 0.0
    %116 = vmatprep.subr.mxu0 0.0
    %117 = vmatpush2.msra.mxu0 0.0
    %118 = vmatprep.subr.mxu0 0.0
    %119 = vmatpush2.msra.mxu0 0.0
    %120 = vmatprep.subr.mxu0 0.0
    %121 = vmatpush2.msra.mxu0 0.0
    %122 = vmatprep.subr.mxu0 0.0
    %123 = vmatpush2.msra.mxu0 0.0
    %124 = vmatprep.subr.mxu0 0.0
    %125 = vmatpush2.msra.mxu0 0.0
    %126 = vmatprep.subr.mxu0 0.0
    %127 = vmatpush2.msra.mxu0 0.0
    %128 = vmatprep.subr.mxu0 0.0
    %129 = vmatpush2.msra.mxu0 0.0
    %130 = vmatprep.subr.mxu0 0.0
    %131 = vmatpush2.msra.mxu0 0.0
    %132 = vmatprep.subr.mxu0 0.0
    %133 = vmatpush2.msra.mxu0 0.0
    %134 = vmatprep.subr.mxu0 0.0
    %135 = vmatpush2.msra.mxu0 0.0
    %136 = vmatprep.mubr.f32.mxu0 0.0
    %137 = vmatmul.mubr.f32.gmra.mxu0 %v66
    %v138 = vpop.f32.mrf.mxu0
    %v139 = vadd.f32 %v62, %v138
    %v140 = vpop.f32.mrf.mxu0
    %141 = vdwg.mxu0
    %v142 = vmax.f32 %v139, 0.0
    %v143 = vld [vmem:[%s3] sm:$0xff]
    %v144 = vld [vmem:[%s3 + $0x8] sm:$0xff]
    %v145 = vld [vmem:[%s3 + $0x10] sm:$0xff]
    %v146 = vld [vmem:[%s3 + $0x18] sm:$0xff]
    %v147 = vld [vmem:[%s3 + $0x20] sm:$0xff]
    %v148 = vld [vmem:[%s3 + $0x28] sm:$0xff]
    %v149 = vld [vmem:[%s3 + $0x30] sm:$0xff]
    %v150 = vld [vmem:[%s3 + $0x38] sm:$0xff]
    %v151 = vld [vmem:[%s3 + $0x40] sm:$0xff]
    %v152 = vld [vmem:[%s3 + $0x48] sm:$0xff]
    %v153 = vld [vmem:[%s3 + $0x50] sm:$0xff]
    %v154 = vld [vmem:[%s3 + $0x58] sm:$0xff]
    %v155 = vld [vmem:[%s3 + $0x60] sm:$0xff]
    %v156 = vld [vmem:[%s3 + $0x68] sm:$0xff]
    %v157 = vld [vmem:[%s3 + $0x70] sm:$0xff]
    %v158 = vld [vmem:[%s3 + $0x78] sm:$0xff]
    %v159 = vld [vmem:[%s4] sm:$0x1]
    %v161 = vlaneseq
    %v162 = vshrl.u32 %v161, 7
    %v163 = vsub.s32 0, %v162
    %v164 = vrot.slane %v159, %v163
    %166 = vmatprep.subr.mxu0 0.0
    %167 = vmatpush1.msra.mxu0 %v158
    %168 = vmatprep.subr.mxu0 0.0
    %169 = vmatpush1.msra.mxu0 %v157
    %170 = vmatprep.subr.mxu0 0.0
    %171 = vmatpush1.msra.mxu0 %v156
    %172 = vmatprep.subr.mxu0 0.0
    %173 = vmatpush1.msra.mxu0 %v155
    %174 = vmatprep.subr.mxu0 0.0
    %175 = vmatpush1.msra.mxu0 %v154
    %176 = vmatprep.subr.mxu0 0.0
    %177 = vmatpush1.msra.mxu0 %v153
    %178 = vmatprep.subr.mxu0 0.0
    %179 = vmatpush1.msra.mxu0 %v152
    %180 = vmatprep.subr.mxu0 0.0
    %181 = vmatpush1.msra.mxu0 %v151
    %182 = vmatprep.subr.mxu0 0.0
    %183 = vmatpush1.msra.mxu0 %v150
    %184 = vmatprep.subr.mxu0 0.0
    %185 = vmatpush1.msra.mxu0 %v149
    %186 = vmatprep.subr.mxu0 0.0
    %187 = vmatpush1.msra.mxu0 %v148
    %188 = vmatprep.subr.mxu0 0.0
    %189 = vmatpush1.msra.mxu0 %v147
    %190 = vmatprep.subr.mxu0 0.0
    %191 = vmatpush1.msra.mxu0 %v146
    %192 = vmatprep.subr.mxu0 0.0
    %193 = vmatpush1.msra.mxu0 %v145
    %194 = vmatprep.subr.mxu0 0.0
    %195 = vmatpush1.msra.mxu0 %v144
    %196 = vmatprep.subr.mxu0 0.0
    %197 = vmatpush1.msra.mxu0 %v143
    %198 = vmatprep.subr.mxu0 0.0
    %199 = vmatpush2.msra.mxu0 0.0
    %200 = vmatprep.subr.mxu0 0.0
    %201 = vmatpush2.msra.mxu0 0.0
    %202 = vmatprep.subr.mxu0 0.0
    %203 = vmatpush2.msra.mxu0 0.0
    %204 = vmatprep.subr.mxu0 0.0
    %205 = vmatpush2.msra.mxu0 0.0
    %206 = vmatprep.subr.mxu0 0.0
    %207 = vmatpush2.msra.mxu0 0.0
    %208 = vmatprep.subr.mxu0 0.0
    %209 = vmatpush2.msra.mxu0 0.0
    %210 = vmatprep.subr.mxu0 0.0
    %211 = vmatpush2.msra.mxu0 0.0
    %212 = vmatprep.subr.mxu0 0.0
    %213 = vmatpush2.msra.mxu0 0.0
    %214 = vmatprep.subr.mxu0 0.0
    %215 = vmatpush2.msra.mxu0 0.0
    %216 = vmatprep.subr.mxu0 0.0
    %217 = vmatpush2.msra.mxu0 0.0
    %218 = vmatprep.subr.mxu0 0.0
    %219 = vmatpush2.msra.mxu0 0.0
    %220 = vmatprep.subr.mxu0 0.0
    %221 = vmatpush2.msra.mxu0 0.0
    %222 = vmatprep.subr.mxu0 0.0
    %223 = vmatpush2.msra.mxu0 0.0
    %224 = vmatprep.subr.mxu0 0.0
    %225 = vmatpush2.msra.mxu0 0.0
    %226 = vmatprep.subr.mxu0 0.0
    %227 = vmatpush2.msra.mxu0 0.0
    %228 = vmatprep.subr.mxu0 0.0
    %229 = vmatpush2.msra.mxu0 0.0
    %230 = vmatprep.mubr.f32.mxu0 0.0
    %231 = vmatmul.mubr.f32.gmra.mxu0 %v142
    %v232 = vpop.f32.mrf.mxu0
    %v233 = vadd.f32 %v164, %v232
    %v234 = vpop.f32.mrf.mxu0
    %235 = vdwg.mxu0
    %v236 = vmax.f32 %v233, 0.0
    %v237 = vld [vmem:[%s5] sm:$0xff]
    %v238 = vld [vmem:[%s5 + $0x8] sm:$0xff]
    %v239 = vld [vmem:[%s5 + $0x10] sm:$0xff]
    %v240 = vld [vmem:[%s5 + $0x18] sm:$0xff]
    %v241 = vld [vmem:[%s5 + $0x20] sm:$0xff]
    %v242 = vld [vmem:[%s5 + $0x28] sm:$0xff]
    %v243 = vld [vmem:[%s5 + $0x30] sm:$0xff]
    %v244 = vld [vmem:[%s5 + $0x38] sm:$0xff]
    %v245 = vld [vmem:[%s5 + $0x40] sm:$0xff]
    %v246 = vld [vmem:[%s5 + $0x48] sm:$0xff]
    %v247 = vld [vmem:[%s5 + $0x50] sm:$0xff]
    %v248 = vld [vmem:[%s5 + $0x58] sm:$0xff]
    %v249 = vld [vmem:[%s5 + $0x60] sm:$0xff]
    %v250 = vld [vmem:[%s5 + $0x68] sm:$0xff]
    %v251 = vld [vmem:[%s5 + $0x70] sm:$0xff]
    %v252 = vld [vmem:[%s5 + $0x78] sm:$0xff]
    %v253 = vld [vmem:[#allocation2] sm:$0x1]
    %v255 = vlaneseq
    %v256 = vshrl.u32 %v255, 7
    %v257 = vsub.s32 0, %v256
    %v258 = vrot.slane %v253, %v257
    %260 = vmatprep.subr.mxu0 0.0
    %261 = vmatpush1.msra.mxu0 %v252
    %262 = vmatprep.subr.mxu0 0.0
    %263 = vmatpush1.msra.mxu0 %v251
    %264 = vmatprep.subr.mxu0 0.0
    %265 = vmatpush1.msra.mxu0 %v250
    %266 = vmatprep.subr.mxu0 0.0
    %267 = vmatpush1.msra.mxu0 %v249
    %268 = vmatprep.subr.mxu0 0.0
    %269 = vmatpush1.msra.mxu0 %v248
    %270 = vmatprep.subr.mxu0 0.0
    %271 = vmatpush1.msra.mxu0 %v247
    %272 = vmatprep.subr.mxu0 0.0
    %273 = vmatpush1.msra.mxu0 %v246
    %274 = vmatprep.subr.mxu0 0.0
    %275 = vmatpush1.msra.mxu0 %v245
    %276 = vmatprep.subr.mxu0 0.0
    %277 = vmatpush1.msra.mxu0 %v244
    %278 = vmatprep.subr.mxu0 0.0
    %279 = vmatpush1.msra.mxu0 %v243
    %280 = vmatprep.subr.mxu0 0.0
    %281 = vmatpush1.msra.mxu0 %v242
    %282 = vmatprep.subr.mxu0 0.0
    %283 = vmatpush1.msra.mxu0 %v241
    %284 = vmatprep.subr.mxu0 0.0
    %285 = vmatpush1.msra.mxu0 %v240
    %286 = vmatprep.subr.mxu0 0.0
    %287 = vmatpush1.msra.mxu0 %v239
    %288 = vmatprep.subr.mxu0 0.0
    %289 = vmatpush1.msra.mxu0 %v238
    %290 = vmatprep.subr.mxu0 0.0
    %291 = vmatpush1.msra.mxu0 %v237
    %292 = vmatprep.subr.mxu0 0.0
    %293 = vmatpush2.msra.mxu0 0.0
    %294 = vmatprep.subr.mxu0 0.0
    %295 = vmatpush2.msra.mxu0 0.0
    %296 = vmatprep.subr.mxu0 0.0
    %297 = vmatpush2.msra.mxu0 0.0
    %298 = vmatprep.subr.mxu0 0.0
    %299 = vmatpush2.msra.mxu0 0.0
    %300 = vmatprep.subr.mxu0 0.0
    %301 = vmatpush2.msra.mxu0 0.0
    %302 = vmatprep.subr.mxu0 0.0
    %303 = vmatpush2.msra.mxu0 0.0
    %304 = vmatprep.subr.mxu0 0.0
    %305 = vmatpush2.msra.mxu0 0.0
    %306 = vmatprep.subr.mxu0 0.0
    %307 = vmatpush2.msra.mxu0 0.0
    %308 = vmatprep.subr.mxu0 0.0
    %309 = vmatpush2.msra.mxu0 0.0
    %310 = vmatprep.subr.mxu0 0.0
    %311 = vmatpush2.msra.mxu0 0.0
    %312 = vmatprep.subr.mxu0 0.0
    %313 = vmatpush2.msra.mxu0 0.0
    %314 = vmatprep.subr.mxu0 0.0
    %315 = vmatpush2.msra.mxu0 0.0
    %316 = vmatprep.subr.mxu0 0.0
    %317 = vmatpush2.msra.mxu0 0.0
    %318 = vmatprep.subr.mxu0 0.0
    %319 = vmatpush2.msra.mxu0 0.0
    %320 = vmatprep.subr.mxu0 0.0
    %321 = vmatpush2.msra.mxu0 0.0
    %322 = vmatprep.subr.mxu0 0.0
    %323 = vmatpush2.msra.mxu0 0.0
    %324 = vmatprep.mubr.f32.mxu0 0.0
    %325 = vmatmul.mubr.f32.gmra.mxu0 %v236
    %v326 = vpop.f32.mrf.mxu0
    %v327 = vadd.f32 %v258, %v326
    %v328 = vpop.f32.mrf.mxu0
    %329 = vdwg.mxu0
    %vm330 = vcmask 7168
    %331 = vst.msk [vmem:[%s7] sm:$0xff] %vm330, %v327
    // Predicated region
    $region38: #{boston_housing_forward.1} parent=1 // pred_check
      _
    $region39: #{boston_housing_forward.1} parent=1 // pred_check_branch
      %333 = sbr.rel (0) target = $region41
    $region40: #{boston_housing_forward.1} parent=1 // pred_region
      _
    $region41: #{boston_housing_forward.1} parent=1 // pred_fallthru
      _
    // Predicated region
    $region42: #{boston_housing_forward.1} parent=1 // pred_check
      _
    $region43: #{boston_housing_forward.1} parent=1 // pred_check_branch
      %335 = sbr.rel (0) target = $region45
    $region44: #{boston_housing_forward.1} parent=1 // pred_region
      _
    $region45: #{boston_housing_forward.1} parent=1 // pred_fallthru
      _
    %336 = vsyncpa [#allocation4], 1
    %337 = vsyncpa [#allocation6], 1

</llo_original>
